<compile_context>
chip_gen: v7x
topology: tpu7x:2x2x1
jax: 0.10.0
libtpu: 0.0.40
codegen_flags: <defaults>
</compile_context>

<pallas_src>
import functools

import jax
import jax.numpy as jnp
from jax import lax
from jax.experimental import pallas as pl
from jax.experimental.pallas import tpu as pltpu


def _round_up(x, m):
    return (x + m - 1) // m * m


def _fused_kernel(n_emb, vocab_offsets, feat_ref, emb_ref, w1_ref, b1_ref,
                  w2_ref, b2_ref, o_ref):
    """One batch tile: gather-as-matmul -> Linear -> ReLU -> Linear."""
    tile_b = feat_ref.shape[0]
    v_tot = emb_ref.shape[0]
    cdt = w1_ref.dtype                                    # compute dtype (f32 / bf16)

    feats = feat_ref[...]                                 # (TILE_B, n_emb) int32

    # Multi-hot over the concatenated vocabulary.  Per-table row ranges are
    # disjoint, so OR-ing the per-table one-hots gives the exact selector.
    iota = lax.broadcasted_iota(jnp.int32, (tile_b, v_tot), 1)
    hot = None
    for i in range(n_emb):                                # unrolled at trace time
        sel = iota == (feats[:, i:i + 1] + vocab_offsets[i])
        hot = sel if hot is None else jnp.logical_or(hot, sel)
    multihot = hot.astype(cdt)                            # (TILE_B, V_tot)

    # x == concat_i emb_i[f_i]   (block-diagonal emb_cat; off-block entries are 0)
    x = jnp.dot(multihot, emb_ref[...],
                preferred_element_type=jnp.float32)       # (TILE_B, D_tot)

    h = jnp.dot(x.astype(cdt), w1_ref[...],
                preferred_element_type=jnp.float32)       # (TILE_B, H_pad)
    h = jnp.maximum(h + b1_ref[...], 0.0)                 # bias + ReLU in f32 (VPU)

    o = jnp.dot(h.astype(cdt), w2_ref[...],
                preferred_element_type=jnp.float32)       # (TILE_B, O_pad)
    o_ref[...] = (o + b2_ref[...]).astype(o_ref.dtype)    # lane-dense store


def network_forward(features, emb_tables, w1, b1, w2, b2,
                    *, tile_b=128, compute_dtype=jnp.float32):
    """features: (B, num_embeddings) int32 (or (num_embeddings,) unbatched).

    w1: (input_dim, hidden), b1: (hidden,), w2: (hidden, out), b2: (out,)
    (weights stored as (in, out), i.e. x @ W + b == PyTorch x @ W_pt.T + b).
    Returns (B, output_dim) float32.
    """
    if features.ndim == 1:  # unbatched path of the reference module
        return network_forward(features[None], emb_tables, w1, b1, w2, b2,
                               tile_b=tile_b, compute_dtype=compute_dtype)[0]

    B, n_emb = features.shape
    input_dim, hidden_dim = w1.shape
    output_dim = w2.shape[1]
    vocab_sizes = [int(t.shape[0]) for t in emb_tables]
    emb_dims = [int(t.shape[1]) for t in emb_tables]
    assert len(emb_tables) == n_emb and sum(emb_dims) == input_dim

    h_pad = _round_up(hidden_dim, 128)
    o_pad = _round_up(output_dim, 128)
    v_tot = sum(vocab_sizes)

    # Block-diagonal stack of all embedding tables (layout plumbing, no compute):
    # row block i = table i's rows, column block i = its embedding_dim columns.
    emb_cat = jnp.zeros((v_tot, input_dim), compute_dtype)
    offsets = []
    voff = doff = 0
    for t, v, d in zip(emb_tables, vocab_sizes, emb_dims):
        offsets.append(voff)
        emb_cat = emb_cat.at[voff:voff + v, doff:doff + d].set(t.astype(compute_dtype))
        voff += v
        doff += d
    offsets = tuple(offsets)

    # Lane-dense zero padding of hidden / output dims.
    w1p = jnp.zeros((input_dim, h_pad), compute_dtype).at[:, :hidden_dim].set(
        w1.astype(compute_dtype))
    b1p = jnp.zeros((1, h_pad), jnp.float32).at[:, :hidden_dim].set(
        jnp.reshape(b1, (1, -1)).astype(jnp.float32))
    w2p = jnp.zeros((h_pad, o_pad), compute_dtype).at[:hidden_dim, :output_dim].set(
        w2.astype(compute_dtype))
    b2p = jnp.zeros((1, o_pad), jnp.float32).at[:, :output_dim].set(
        jnp.reshape(b2, (1, -1)).astype(jnp.float32))

    # Batch tiling (pad B up; index 0 is a valid row of every table).
    tile_b = min(tile_b, _round_up(B, 8))
    b_pad = _round_up(B, tile_b)
    feats = features.astype(jnp.int32)
    if b_pad != B:
        feats = jnp.pad(feats, ((0, b_pad - B), (0, 0)))

    const = lambda i: (0, 0)  # weights / tables / biases stay VMEM-resident
    out = pl.pallas_call(
        functools.partial(_fused_kernel, n_emb, offsets),
        out_shape=jax.ShapeDtypeStruct((b_pad, o_pad), jnp.float32),
        grid=(b_pad // tile_b,),
        in_specs=[
            pl.BlockSpec((tile_b, n_emb), lambda i: (i, 0)),
            pl.BlockSpec(emb_cat.shape, const),
            pl.BlockSpec(w1p.shape, const),
            pl.BlockSpec(b1p.shape, const),
            pl.BlockSpec(w2p.shape, const),
            pl.BlockSpec(b2p.shape, const),
        ],
        out_specs=pl.BlockSpec((tile_b, o_pad), lambda i: (i, 0)),
        compiler_params=pltpu.CompilerParams(
            dimension_semantics=("parallel",),   # shard batch across TCs (v7x)
            vmem_limit_bytes=32 << 20,           # safe on v5e/v6e/v7x
        ),
    )(feats, emb_cat, w1p, b1p, w2p, b2p)

    return out[:B, :output_dim]


if __name__ == "__main__":
    key = jax.random.PRNGKey(0)

    # Small deterministic config
    batch = 200                        # exercises padding (200 -> 256) and a 2-step grid
    vocab_sizes = [10, 20, 15]         # num_embeddings per table
    emb_dims = [8, 16, 8]              # embedding_dim per table
    input_dim = sum(emb_dims)          # 32
    hidden_dim = 32
    output_dim = 8

    keys = jax.random.split(key, 8)

    emb_tables = [
        jax.random.normal(keys[i], (V, D), dtype=jnp.float32) * 0.1
        for i, (V, D) in enumerate(zip(vocab_sizes, emb_dims))
    ]
    w1 = jax.random.normal(keys[3], (input_dim, hidden_dim), dtype=jnp.float32) * 0.1
    b1 = jax.random.normal(keys[4], (hidden_dim,), dtype=jnp.float32) * 0.01
    w2 = jax.random.normal(keys[5], (hidden_dim, output_dim), dtype=jnp.float32) * 0.1
    b2 = jax.random.normal(keys[6], (output_dim,), dtype=jnp.float32) * 0.01

    features = jnp.stack(
        [jax.random.randint(jax.random.fold_in(keys[7], i), (batch,), 0, V)
         for i, V in enumerate(vocab_sizes)],
        axis=1,
    ).astype(jnp.int32)

    # f32 compute path
    out = network_forward(features, emb_tables, w1, b1, w2, b2)
    out = jax.block_until_ready(out)

    # Reference in plain JAX (same math, no Pallas)
    x_ref = jnp.concatenate(
        [tbl[features[:, i]] for i, tbl in enumerate(emb_tables)], axis=-1)
    ref = jnp.maximum(x_ref @ w1 + b1, 0.0) @ w2 + b2
    assert out.shape == (batch, output_dim)
    assert jnp.allclose(out, ref, atol=1e-4, rtol=1e-4), float(jnp.abs(out - ref).max())

    # bf16 MXU-operand path (recommended on v6e / v7x) -- loose tolerance
    out_bf16 = jax.block_until_ready(
        network_forward(features, emb_tables, w1, b1, w2, b2,
                        compute_dtype=jnp.bfloat16))
    assert jnp.allclose(out_bf16, ref, atol=5e-2, rtol=5e-2)

    # unbatched path (features of shape (num_embeddings,)) like the reference module
    out1 = jax.block_until_ready(
        network_forward(features[0], emb_tables, w1, b1, w2, b2))
    assert out1.shape == (output_dim,)
    assert jnp.allclose(out1, ref[0], atol=1e-4, rtol=1e-4)

    # TODO(synk): the reference module's try/except -> IPython.embed() debug hook
    # has no Pallas equivalent and is intentionally omitted.
    print("KERNEL_OK")
</pallas_src>

<mosaic_0001>
module attributes {stable_mosaic.version = 11 : i64} {
  func.func @_fused_kernel(%arg0: i32, %arg1: memref<128x3xi32, #tpu.memory_space<vmem>>, %arg2: memref<45x32xf32, #tpu.memory_space<vmem>>, %arg3: memref<32x128xf32, #tpu.memory_space<vmem>>, %arg4: memref<1x128xf32, #tpu.memory_space<vmem>>, %arg5: memref<128x128xf32, #tpu.memory_space<vmem>>, %arg6: memref<1x128xf32, #tpu.memory_space<vmem>>, %arg7: memref<128x128xf32, #tpu.memory_space<vmem>>) attributes {dimension_semantics = [#tpu.dimension_semantics<parallel>], iteration_bounds = array<i64: 2>, scalar_prefetch = 0 : i64, scratch_operands = 0 : i64, tpu.core_type = #tpu.core_type<tc>, window_params = [{transform_indices = @transform_0, window_bounds = array<i64: 128, 3>}, {pipeline_mode = #tpu.pipeline_mode<synchronous>, transform_indices = @transform_1, window_bounds = array<i64: 45, 32>}, {pipeline_mode = #tpu.pipeline_mode<synchronous>, transform_indices = @transform_2, window_bounds = array<i64: 32, 128>}, {pipeline_mode = #tpu.pipeline_mode<synchronous>, transform_indices = @transform_3, window_bounds = array<i64: 1, 128>}, {pipeline_mode = #tpu.pipeline_mode<synchronous>, transform_indices = @transform_4, window_bounds = array<i64: 128, 128>}, {pipeline_mode = #tpu.pipeline_mode<synchronous>, transform_indices = @transform_5, window_bounds = array<i64: 1, 128>}, {transform_indices = @transform_6, window_bounds = array<i64: 128, 128>}]} {
    %c0 = arith.constant 0 : index
    %c0_0 = arith.constant 0 : index
    %0 = vector.load %arg1[%c0, %c0_0] : memref<128x3xi32, #tpu.memory_space<vmem>>, vector<128x3xi32>
    %1 = tpu.iota {dimensions = array<i32: 1>} : vector<128x45xi32>
    %2 = vector.extract_strided_slice %0 {offsets = [0, 0], sizes = [128, 1], strides = [1, 1]} : vector<128x3xi32> to vector<128x1xi32>
    %c0_i32 = arith.constant 0 : i32
    %3 = vector.broadcast %c0_i32 : i32 to vector<128x1xi32>
    %4 = arith.addi %2, %3 : vector<128x1xi32>
    %5 = vector.broadcast %4 : vector<128x1xi32> to vector<128x45xi32>
    %6 = arith.cmpi eq, %1, %5 : vector<128x45xi32>
    %7 = vector.extract_strided_slice %0 {offsets = [0, 1], sizes = [128, 1], strides = [1, 1]} : vector<128x3xi32> to vector<128x1xi32>
    %c10_i32 = arith.constant 10 : i32
    %8 = vector.broadcast %c10_i32 : i32 to vector<128x1xi32>
    %9 = arith.addi %7, %8 : vector<128x1xi32>
    %10 = vector.broadcast %9 : vector<128x1xi32> to vector<128x45xi32>
    %11 = arith.cmpi eq, %1, %10 : vector<128x45xi32>
    %12 = arith.ori %6, %11 : vector<128x45xi1>
    %13 = vector.extract_strided_slice %0 {offsets = [0, 2], sizes = [128, 1], strides = [1, 1]} : vector<128x3xi32> to vector<128x1xi32>
    %c30_i32 = arith.constant 30 : i32
    %14 = vector.broadcast %c30_i32 : i32 to vector<128x1xi32>
    %15 = arith.addi %13, %14 : vector<128x1xi32>
    %16 = vector.broadcast %15 : vector<128x1xi32> to vector<128x45xi32>
    %17 = arith.cmpi eq, %1, %16 : vector<128x45xi32>
    %18 = arith.ori %12, %17 : vector<128x45xi1>
    %19 = arith.extui %18 : vector<128x45xi1> to vector<128x45xi32>
    %20 = arith.sitofp %19 : vector<128x45xi32> to vector<128x45xf32>
    %c0_1 = arith.constant 0 : index
    %c0_2 = arith.constant 0 : index
    %21 = vector.load %arg2[%c0_1, %c0_2] : memref<45x32xf32, #tpu.memory_space<vmem>>, vector<45x32xf32>
    %cst = arith.constant dense<0.000000e+00> : vector<128x32xf32>
    %22 = tpu.matmul %20, %21, %cst {dimension_numbers = #tpu.dot_dimension_numbers<[1], [0], [0], [1], [0, 0, 1, 1], [], []>} : vector<128x45xf32>, vector<45x32xf32>, vector<128x32xf32> -> vector<128x32xf32>
    %c0_3 = arith.constant 0 : index
    %c0_4 = arith.constant 0 : index
    %23 = vector.load %arg3[%c0_3, %c0_4] : memref<32x128xf32, #tpu.memory_space<vmem>>, vector<32x128xf32>
    %cst_5 = arith.constant dense<0.000000e+00> : vector<128x128xf32>
    %24 = tpu.matmul %22, %23, %cst_5 {dimension_numbers = #tpu.dot_dimension_numbers<[1], [0], [0], [1], [0, 0, 1, 1], [], []>} : vector<128x32xf32>, vector<32x128xf32>, vector<128x128xf32> -> vector<128x128xf32>
    %c0_6 = arith.constant 0 : index
    %c0_7 = arith.constant 0 : index
    %25 = vector.load %arg4[%c0_6, %c0_7] : memref<1x128xf32, #tpu.memory_space<vmem>>, vector<1x128xf32>
    %26 = vector.broadcast %25 : vector<1x128xf32> to vector<128x128xf32>
    %27 = arith.addf %24, %26 : vector<128x128xf32>
    %cst_8 = arith.constant 0.000000e+00 : f32
    %28 = vector.broadcast %cst_8 : f32 to vector<128x128xf32>
    %29 = arith.maximumf %27, %28 : vector<128x128xf32>
    %c0_9 = arith.constant 0 : index
    %c0_10 = arith.constant 0 : index
    %30 = vector.load %arg5[%c0_9, %c0_10] : memref<128x128xf32, #tpu.memory_space<vmem>>, vector<128x128xf32>
    %cst_11 = arith.constant dense<0.000000e+00> : vector<128x128xf32>
    %31 = tpu.matmul %29, %30, %cst_11 {dimension_numbers = #tpu.dot_dimension_numbers<[1], [0], [0], [1], [0, 0, 1, 1], [], []>} : vector<128x128xf32>, vector<128x128xf32>, vector<128x128xf32> -> vector<128x128xf32>
    %c0_12 = arith.constant 0 : index
    %c0_13 = arith.constant 0 : index
    %32 = vector.load %arg6[%c0_12, %c0_13] : memref<1x128xf32, #tpu.memory_space<vmem>>, vector<1x128xf32>
    %33 = vector.broadcast %32 : vector<1x128xf32> to vector<128x128xf32>
    %34 = arith.addf %31, %33 : vector<128x128xf32>
    %c0_14 = arith.constant 0 : index
    %c0_15 = arith.constant 0 : index
    %35 = vector.load %arg7[%c0_14, %c0_15] : memref<128x128xf32, #tpu.memory_space<vmem>>, vector<128x128xf32>
    tpu.vector_store %arg7[%c0_14, %c0_15], %34 {strides = array<i32>} : memref<128x128xf32, #tpu.memory_space<vmem>>, vector<128x128xf32>,
    return
  }
  func.func @transform_0(%arg0: i32) -> (i32, i32) {
    %c0_i32 = arith.constant 0 : i32
    %c0_i32_0 = arith.constant 0 : i32
    return %arg0, %c0_i32 : i32, i32
  }
  func.func @transform_1(%arg0: i32) -> (i32, i32) {
    %c0_i32 = arith.constant 0 : i32
    %c0_i32_0 = arith.constant 0 : i32
    %c0_i32_1 = arith.constant 0 : i32
    return %c0_i32, %c0_i32_0 : i32, i32
  }
  func.func @transform_2(%arg0: i32) -> (i32, i32) {
    %c0_i32 = arith.constant 0 : i32
    %c0_i32_0 = arith.constant 0 : i32
    %c0_i32_1 = arith.constant 0 : i32
    return %c0_i32, %c0_i32_0 : i32, i32
  }
  func.func @transform_3(%arg0: i32) -> (i32, i32) {
    %c0_i32 = arith.constant 0 : i32
    %c0_i32_0 = arith.constant 0 : i32
    %c0_i32_1 = arith.constant 0 : i32
    return %c0_i32, %c0_i32_0 : i32, i32
  }
  func.func @transform_4(%arg0: i32) -> (i32, i32) {
    %c0_i32 = arith.constant 0 : i32
    %c0_i32_0 = arith.constant 0 : i32
    %c0_i32_1 = arith.constant 0 : i32
    return %c0_i32, %c0_i32_0 : i32, i32
  }
  func.func @transform_5(%arg0: i32) -> (i32, i32) {
    %c0_i32 = arith.constant 0 : i32
    %c0_i32_0 = arith.constant 0 : i32
    %c0_i32_1 = arith.constant 0 : i32
    return %c0_i32, %c0_i32_0 : i32, i32
  }
  func.func @transform_6(%arg0: i32) -> (i32, i32) {
    %c0_i32 = arith.constant 0 : i32
    %c0_i32_0 = arith.constant 0 : i32
    return %arg0, %c0_i32 : i32, i32
  }
}

</mosaic_0001>

<llo_original>
// kernel: tpu_custom_call.1
$region0: #{tpu_custom_call.1}
  #allocation0 [shape = 'u32[]', space=smem, size = 0x4, offset = 0x4, fixed_abs, tag = 'smem constant byte address 0x4 - core index']
  #allocation1 [shape = 'u32[144,128]{1,0:T(1,128)}', space=vmem, size = 0x12000, scoped, tag = 'internal scratch']
  %s0 = inlined_call_operand.vmem [shape: s32[256,3], index: 0, kind: input, shape index: {}]
  %s1 = inlined_call_operand.vmem [shape: f32[45,32], index: 1, kind: input, shape index: {}]
  %s2 = inlined_call_operand.vmem [shape: f32[32,128], index: 2, kind: input, shape index: {}]
  %s3 = inlined_call_operand.vmem [shape: f32[1,128], index: 3, kind: input, shape index: {}]
  %s4 = inlined_call_operand.vmem [shape: f32[128,128], index: 4, kind: input, shape index: {}]
  %s5 = inlined_call_operand.vmem [shape: f32[1,128], index: 5, kind: input, shape index: {}]
  %s6 = inlined_call_operand.hbm [shape: f32[256,128], index: 6, kind: output, shape index: {}]
  %s7 = sld [smem:[#allocation0]]
  $region57: #{tpu_custom_call.1} parent=0
    _
  %s9 = ssub.s32 1, %s7
  %s10 = scalar_select 0, %s9, %s7
  $region1: #{tpu_custom_call.1} parent=0
    #allocation2 [shape = 'u8[131072]{0}', space=vmem, size = 0x20000, scoped, tag = 'output window, operand 0']
    #allocation3 [shape = 's32[2]{0}', space=sflag, size = 0x8, scoped, tag = 'scoped memory for tpu_custom_call.1']
    %11 = vsyncpa [#allocation3], 0
    %s12 = scalar_lea.sflag [#allocation3], 1
    %13 = vsyncpa %s12, 0
    loop: start=0, step=1, limit=4
    $region2: #{tpu_custom_call.1} parent=1 // loop_pre_header
      _
    $region3: #{tpu_custom_call.1} parent=1 // loop_header
      %s15 = sphi 0, %s19
      %p16 = scmp.ge.s32.totalorder %s15, 4
      %s25 = sphi 0, %s27
      %s28 = sphi 0, %s25
      %s29 = sphi 0, %s28
      %s45 = sphi 0, %s29
      %s49 = sphi 0, %s49
      %s51 = sphi 0, %s49
      %s52 = sphi 0, %s51
      %s66 = sphi 0, %s52
      %s70 = sphi 0, %s70
      %s72 = sphi 0, %s70
      %s73 = sphi 0, %s72
      %s87 = sphi 0, %s73
      %s91 = sphi 0, %s91
      %s93 = sphi 0, %s91
      %s94 = sphi 0, %s93
      %s108 = sphi 0, %s94
      %s112 = sphi 0, %s112
      %s114 = sphi 0, %s112
      %s115 = sphi 0, %s114
      %s129 = sphi 0, %s115
      %s133 = sphi 0, %s133
      %s135 = sphi 0, %s133
      %s136 = sphi 0, %s135
      %s150 = sphi 0, %s136
      %s156 = sphi 0, %s158
      %s159 = sphi 0, %s156
      %s160 = sphi 0, %s159
      %s176 = sphi 0, %s160
    $region4: #{tpu_custom_call.1} parent=1 // loop_header_branch
      %18 = sbr.rel (%p16) target = $region8
    $region5: #{tpu_custom_call.1} parent=1 // loop_body
      %s20 = ssub.s32 %s15, 1
      %s21 = ssub.s32 %s15, 2
      %s22 = sadd.s32 %s15, 1
      %s23 = ssub.s32 %s15, %s22
      %p24 = scmp.eq.s32.totalorder %s23, 0
      %s26 = sadd.s32 %s25, 1
      %s27 = scalar_select %p24, %s25, %s26
      %p30 = pneg %p24
      %p31 = scmp.eq.s32.totalorder %s15, 1
      %p32 = por %p30, %p31
      %p33 = scmp.ne.s32.totalorder %s25, %s28
      %p34 = scmp.eq.s32.totalorder %s15, 0
      %p35 = por %p33, %p34
      %p36 = scmp.ne.s32.totalorder %s25, %s28
      %p37 = scmp.eq.s32.totalorder %s20, 1
      %p38 = por %p36, %p37
      %p39 = scmp.ne.s32.totalorder %s28, %s29
      %p40 = scmp.eq.s32.totalorder %s20, 0
      %p41 = por %p39, %p40
      %p42 = scmp.ne.s32.totalorder %s28, %s29
      %p43 = scmp.eq.s32.totalorder %s21, 1
      %p44 = por %p42, %p43
      %p46 = scmp.ne.s32.totalorder %s29, %s45
      %p47 = scmp.eq.s32.totalorder %s21, 0
      %p48 = por %p46, %p47
      %s50 = sadd.s32 %s49, 1
      %p53 = scmp.eq.s32.totalorder %s15, 1
      %p54 = scmp.ne.s32.totalorder %s49, %s51
      %p55 = scmp.eq.s32.totalorder %s15, 0
      %p56 = por %p54, %p55
      %p57 = scmp.ne.s32.totalorder %s49, %s51
      %p58 = scmp.eq.s32.totalorder %s20, 1
      %p59 = por %p57, %p58
      %p60 = scmp.ne.s32.totalorder %s51, %s52
      %p61 = scmp.eq.s32.totalorder %s20, 0
      %p62 = por %p60, %p61
      %p63 = scmp.ne.s32.totalorder %s51, %s52
      %p64 = scmp.eq.s32.totalorder %s21, 1
      %p65 = por %p63, %p64
      %p67 = scmp.ne.s32.totalorder %s52, %s66
      %p68 = scmp.eq.s32.totalorder %s21, 0
      %p69 = por %p67, %p68
      %s71 = sadd.s32 %s70, 1
      %p74 = scmp.eq.s32.totalorder %s15, 1
      %p75 = scmp.ne.s32.totalorder %s70, %s72
      %p76 = scmp.eq.s32.totalorder %s15, 0
      %p77 = por %p75, %p76
      %p78 = scmp.ne.s32.totalorder %s70, %s72
      %p79 = scmp.eq.s32.totalorder %s20, 1
      %p80 = por %p78, %p79
      %p81 = scmp.ne.s32.totalorder %s72, %s73
      %p82 = scmp.eq.s32.totalorder %s20, 0
      %p83 = por %p81, %p82
      %p84 = scmp.ne.s32.totalorder %s72, %s73
      %p85 = scmp.eq.s32.totalorder %s21, 1
      %p86 = por %p84, %p85
      %p88 = scmp.ne.s32.totalorder %s73, %s87
      %p89 = scmp.eq.s32.totalorder %s21, 0
      %p90 = por %p88, %p89
      %s92 = sadd.s32 %s91, 1
      %p95 = scmp.eq.s32.totalorder %s15, 1
      %p96 = scmp.ne.s32.totalorder %s91, %s93
      %p97 = scmp.eq.s32.totalorder %s15, 0
      %p98 = por %p96, %p97
      %p99 = scmp.ne.s32.totalorder %s91, %s93
      %p100 = scmp.eq.s32.totalorder %s20, 1
      %p101 = por %p99, %p100
      %p102 = scmp.ne.s32.totalorder %s93, %s94
      %p103 = scmp.eq.s32.totalorder %s20, 0
      %p104 = por %p102, %p103
      %p105 = scmp.ne.s32.totalorder %s93, %s94
      %p106 = scmp.eq.s32.totalorder %s21, 1
      %p107 = por %p105, %p106
      %p109 = scmp.ne.s32.totalorder %s94, %s108
      %p110 = scmp.eq.s32.totalorder %s21, 0
      %p111 = por %p109, %p110
      %s113 = sadd.s32 %s112, 1
      %p116 = scmp.eq.s32.totalorder %s15, 1
      %p117 = scmp.ne.s32.totalorder %s112, %s114
      %p118 = scmp.eq.s32.totalorder %s15, 0
      %p119 = por %p117, %p118
      %p120 = scmp.ne.s32.totalorder %s112, %s114
      %p121 = scmp.eq.s32.totalorder %s20, 1
      %p122 = por %p120, %p121
      %p123 = scmp.ne.s32.totalorder %s114, %s115
      %p124 = scmp.eq.s32.totalorder %s20, 0
      %p125 = por %p123, %p124
      %p126 = scmp.ne.s32.totalorder %s114, %s115
      %p127 = scmp.eq.s32.totalorder %s21, 1
      %p128 = por %p126, %p127
      %p130 = scmp.ne.s32.totalorder %s115, %s129
      %p131 = scmp.eq.s32.totalorder %s21, 0
      %p132 = por %p130, %p131
      %s134 = sadd.s32 %s133, 1
      %p137 = scmp.eq.s32.totalorder %s15, 1
      %p138 = scmp.ne.s32.totalorder %s133, %s135
      %p139 = scmp.eq.s32.totalorder %s15, 0
      %p140 = por %p138, %p139
      %p141 = scmp.ne.s32.totalorder %s133, %s135
      %p142 = scmp.eq.s32.totalorder %s20, 1
      %p143 = por %p141, %p142
      %p144 = scmp.ne.s32.totalorder %s135, %s136
      %p145 = scmp.eq.s32.totalorder %s20, 0
      %p146 = por %p144, %p145
      %p147 = scmp.ne.s32.totalorder %s135, %s136
      %p148 = scmp.eq.s32.totalorder %s21, 1
      %p149 = por %p147, %p148
      %p151 = scmp.ne.s32.totalorder %s136, %s150
      %p152 = scmp.eq.s32.totalorder %s21, 0
      %p153 = por %p151, %p152
      %s154 = ssub.s32 %s15, %s22
      %p155 = scmp.eq.s32.totalorder %s154, 0
      %s157 = sadd.s32 %s156, 1
      %s158 = scalar_select %p155, %s156, %s157
      %p161 = pneg %p155
      %p162 = scmp.eq.s32.totalorder %s15, 1
      %p163 = por %p161, %p162
      %p164 = scmp.ne.s32.totalorder %s156, %s159
      %p165 = scmp.eq.s32.totalorder %s15, 0
      %p166 = por %p164, %p165
      %p167 = scmp.ne.s32.totalorder %s156, %s159
      %p168 = scmp.eq.s32.totalorder %s20, 1
      %p169 = por %p167, %p168
      %p170 = scmp.ne.s32.totalorder %s159, %s160
      %p171 = scmp.eq.s32.totalorder %s20, 0
      %p172 = por %p170, %p171
      %p173 = scmp.ne.s32.totalorder %s159, %s160
      %p174 = scmp.eq.s32.totalorder %s21, 1
      %p175 = por %p173, %p174
      %p177 = scmp.ne.s32.totalorder %s160, %s176
      %p178 = scmp.eq.s32.totalorder %s21, 0
      %p179 = por %p177, %p178
      %p180 = scmp.le.s32.totalorder 1, %s15
      %p181 = scmp.lt.s32.totalorder %s15, 3
      %p182 = pnand %p180, %p181
      %p183 = pneg %p182
      // Predicated region
      $region9: #{tpu_custom_call.1} parent=5 // pred_check
        _
      $region10: #{tpu_custom_call.1} parent=5 // pred_check_branch
        %185 = sbr.rel (%p182) target = $region12
      $region11: #{tpu_custom_call.1} parent=5 // pred_region
        %s186 = ssub.s32 %s15, 1
        // Predicated region
        $region13: #{tpu_custom_call.1} parent=11 // pred_check
          %p187 = pneg %p62
        $region14: #{tpu_custom_call.1} parent=11 // pred_check_branch
          %189 = sbr.rel (%p187) target = $region16
        $region15: #{tpu_custom_call.1} parent=11 // pred_region
          _
        $region16: #{tpu_custom_call.1} parent=11 // pred_fallthru
          _
        // Predicated region
        $region17: #{tpu_custom_call.1} parent=11 // pred_check
          %p190 = pneg %p83
        $region18: #{tpu_custom_call.1} parent=11 // pred_check_branch
          %192 = sbr.rel (%p190) target = $region20
        $region19: #{tpu_custom_call.1} parent=11 // pred_region
          _
        $region20: #{tpu_custom_call.1} parent=11 // pred_fallthru
          _
        // Predicated region
        $region21: #{tpu_custom_call.1} parent=11 // pred_check
          %p193 = pneg %p104
        $region22: #{tpu_custom_call.1} parent=11 // pred_check_branch
          %195 = sbr.rel (%p193) target = $region24
        $region23: #{tpu_custom_call.1} parent=11 // pred_region
          _
        $region24: #{tpu_custom_call.1} parent=11 // pred_fallthru
          _
        // Predicated region
        $region25: #{tpu_custom_call.1} parent=11 // pred_check
          %p196 = pneg %p125
        $region26: #{tpu_custom_call.1} parent=11 // pred_check_branch
          %198 = sbr.rel (%p196) target = $region28
        $region27: #{tpu_custom_call.1} parent=11 // pred_region
          _
        $region28: #{tpu_custom_call.1} parent=11 // pred_fallthru
          _
        // Predicated region
        $region29: #{tpu_custom_call.1} parent=11 // pred_check
          %p199 = pneg %p146
        $region30: #{tpu_custom_call.1} parent=11 // pred_check_branch
          %201 = sbr.rel (%p199) target = $region32
        $region31: #{tpu_custom_call.1} parent=11 // pred_region
          _
        $region32: #{tpu_custom_call.1} parent=11 // pred_fallthru
          _
      $region12: #{tpu_custom_call.1} parent=5 // pred_fallthru
        _
      %p202 = scmp.lt.s32.totalorder %s15, 2
      // Predicated region
      $region33: #{tpu_custom_call.1} parent=5 // pred_check
        %p203 = pneg %p202
      $region34: #{tpu_custom_call.1} parent=5 // pred_check_branch
        %205 = sbr.rel (%p203) target = $region36
      $region35: #{tpu_custom_call.1} parent=5 // pred_region
        // Predicated region
        $region37: #{tpu_custom_call.1} parent=35 // pred_check
          %p206 = pneg %p35
        $region38: #{tpu_custom_call.1} parent=35 // pred_check_branch
          %208 = sbr.rel (%p206) target = $region40
        $region39: #{tpu_custom_call.1} parent=35 // pred_region
          %s209 = smul.u32 16, %s15
          %p210 = scmp.lt.s32.totalorder %s209, 31
          %s211 = scalar_select %p210, %s209, 31
          %s212 = smul.addr %s211, 8
          %s213 = scalar_lea.vmem %s0, %s212
          %s214 = smul.u32 16, %s15
        $region40: #{tpu_custom_call.1} parent=35 // pred_fallthru
          _
      $region36: #{tpu_custom_call.1} parent=5 // pred_fallthru
        _
      %p215 = scmp.le.s32.totalorder 1, %s15
      %p216 = scmp.lt.s32.totalorder %s15, 3
      %p217 = pnand %p215, %p216
      %p218 = pneg %p217
      // Predicated region
      $region41: #{tpu_custom_call.1} parent=5 // pred_check
        _
      $region42: #{tpu_custom_call.1} parent=5 // pred_check_branch
        %220 = sbr.rel (%p217) target = $region44
      $region43: #{tpu_custom_call.1} parent=5 // pred_region
        %s221 = ssub.s32 %s15, 1
        %s222 = smul.u32 16, %s20
        %p223 = scmp.lt.s32.totalorder %s222, 31
        %s224 = scalar_select %p223, %s222, 31
        %s225 = smul.addr %s224, 8
        %s226 = scalar_lea.vmem %s0, %s225
        %p227 = pneg %p41
        %p228 = pneg %p38
        %p229 = pneg %p62
        %p230 = pneg %p59
        %p231 = pneg %p83
        %p232 = pneg %p80
        %p233 = pneg %p104
        %p234 = pneg %p101
        %p235 = pneg %p125
        %p236 = pneg %p122
        %p237 = pneg %p146
        %p238 = pneg %p143
        %p239 = pneg %p172
        %p240 = pneg %p169
        %s241 = sand.u32 %s159, 1
        %s242 = scalar_lea.sflag [#allocation3], %s241
        %s243 = sand.u32 %s159, 1
        %s244 = smul.addr %s243, 128
        %s245 = scalar_lea.vmem [#allocation2], %s244
        %s246 = smul.u32 16, %s20
        %p247 = scmp.lt.s32.totalorder %s246, 31
        %s248 = scalar_select %p247, %s246, 31
        %s249 = smul.addr %s248, 8
        %s250 = scalar_lea.vmem %s0, %s249
        %s251 = smul.u32 16, %s20
        %s252 = smul.u32 16, %s20
        %v253 = vld [vmem:[%s250] sm:$0xff]
        %v254 = vld [vmem:[%s250 + $0x8] sm:$0xff]
        %v255 = vld [vmem:[%s250 + $0x10] sm:$0xff]
        %v256 = vld [vmem:[%s250 + $0x18] sm:$0xff]
        %v257 = vld [vmem:[%s250 + $0x20] sm:$0xff]
        %v258 = vld [vmem:[%s250 + $0x28] sm:$0xff]
        %v259 = vld [vmem:[%s250 + $0x30] sm:$0xff]
        %v260 = vld [vmem:[%s250 + $0x38] sm:$0xff]
        %v261 = vld [vmem:[%s250 + $0x40] sm:$0xff]
        %v262 = vld [vmem:[%s250 + $0x48] sm:$0xff]
        %v263 = vld [vmem:[%s250 + $0x50] sm:$0xff]
        %v264 = vld [vmem:[%s250 + $0x58] sm:$0xff]
        %v265 = vld [vmem:[%s250 + $0x60] sm:$0xff]
        %v266 = vld [vmem:[%s250 + $0x68] sm:$0xff]
        %v267 = vld [vmem:[%s250 + $0x70] sm:$0xff]
        %v268 = vld [vmem:[%s250 + $0x78] sm:$0xff]
        %v269 = vlaneseq
        %v270 = vand.u32 %v269, 127
        %271 = vset.pattern.permute.xlu0 0
        %272 = vperm.xlu0 %271, %v253
        %v273 = vpop.permute.xlu0 %272
        %274 = vset.pattern.permute.xlu0 0
        %275 = vperm.xlu0 %274, %v254
        %v276 = vpop.permute.xlu0 %275
        %277 = vset.pattern.permute.xlu0 0
        %278 = vperm.xlu0 %277, %v255
        %v279 = vpop.permute.xlu0 %278
        %280 = vset.pattern.permute.xlu0 0
        %281 = vperm.xlu0 %280, %v256
        %v282 = vpop.permute.xlu0 %281
        %283 = vset.pattern.permute.xlu0 0
        %284 = vperm.xlu0 %283, %v257
        %v285 = vpop.permute.xlu0 %284
        %286 = vset.pattern.permute.xlu0 0
        %287 = vperm.xlu0 %286, %v258
        %v288 = vpop.permute.xlu0 %287
        %289 = vset.pattern.permute.xlu0 0
        %290 = vperm.xlu0 %289, %v259
        %v291 = vpop.permute.xlu0 %290
        %292 = vset.pattern.permute.xlu0 0
        %293 = vperm.xlu0 %292, %v260
        %v294 = vpop.permute.xlu0 %293
        %295 = vset.pattern.permute.xlu0 0
        %296 = vperm.xlu0 %295, %v261
        %v297 = vpop.permute.xlu0 %296
        %298 = vset.pattern.permute.xlu0 0
        %299 = vperm.xlu0 %298, %v262
        %v300 = vpop.permute.xlu0 %299
        %301 = vset.pattern.permute.xlu0 0
        %302 = vperm.xlu0 %301, %v263
        %v303 = vpop.permute.xlu0 %302
        %304 = vset.pattern.permute.xlu0 0
        %305 = vperm.xlu0 %304, %v264
        %v306 = vpop.permute.xlu0 %305
        %307 = vset.pattern.permute.xlu0 0
        %308 = vperm.xlu0 %307, %v265
        %v309 = vpop.permute.xlu0 %308
        %310 = vset.pattern.permute.xlu0 0
        %311 = vperm.xlu0 %310, %v266
        %v312 = vpop.permute.xlu0 %311
        %313 = vset.pattern.permute.xlu0 0
        %314 = vperm.xlu0 %313, %v267
        %v315 = vpop.permute.xlu0 %314
        %316 = vset.pattern.permute.xlu0 0
        %317 = vperm.xlu0 %316, %v268
        %v318 = vpop.permute.xlu0 %317
        %vm319 = vcmp.eq.s32.totalorder %v270, %v273
        %vm320 = vcmp.eq.s32.totalorder %v270, %v276
        %vm321 = vcmp.eq.s32.totalorder %v270, %v279
        %vm322 = vcmp.eq.s32.totalorder %v270, %v282
        %vm323 = vcmp.eq.s32.totalorder %v270, %v285
        %vm324 = vcmp.eq.s32.totalorder %v270, %v288
        %vm325 = vcmp.eq.s32.totalorder %v270, %v291
        %vm326 = vcmp.eq.s32.totalorder %v270, %v294
        %vm327 = vcmp.eq.s32.totalorder %v270, %v297
        %vm328 = vcmp.eq.s32.totalorder %v270, %v300
        %vm329 = vcmp.eq.s32.totalorder %v270, %v303
        %vm330 = vcmp.eq.s32.totalorder %v270, %v306
        %vm331 = vcmp.eq.s32.totalorder %v270, %v309
        %vm332 = vcmp.eq.s32.totalorder %v270, %v312
        %vm333 = vcmp.eq.s32.totalorder %v270, %v315
        %vm334 = vcmp.eq.s32.totalorder %v270, %v318
        %v335 = vadd.s32 %v253, 10
        %v336 = vadd.s32 %v254, 10
        %v337 = vadd.s32 %v255, 10
        %v338 = vadd.s32 %v256, 10
        %v339 = vadd.s32 %v257, 10
        %v340 = vadd.s32 %v258, 10
        %v341 = vadd.s32 %v259, 10
        %v342 = vadd.s32 %v260, 10
        %v343 = vadd.s32 %v261, 10
        %v344 = vadd.s32 %v262, 10
        %v345 = vadd.s32 %v263, 10
        %v346 = vadd.s32 %v264, 10
        %v347 = vadd.s32 %v265, 10
        %v348 = vadd.s32 %v266, 10
        %v349 = vadd.s32 %v267, 10
        %v350 = vadd.s32 %v268, 10
        %351 = vset.pattern.permute.xlu0 1
        %352 = vperm.xlu0 %351, %v335
        %v353 = vpop.permute.xlu0 %352
        %354 = vset.pattern.permute.xlu0 1
        %355 = vperm.xlu0 %354, %v336
        %v356 = vpop.permute.xlu0 %355
        %357 = vset.pattern.permute.xlu0 1
        %358 = vperm.xlu0 %357, %v337
        %v359 = vpop.permute.xlu0 %358
        %360 = vset.pattern.permute.xlu0 1
        %361 = vperm.xlu0 %360, %v338
        %v362 = vpop.permute.xlu0 %361
        %363 = vset.pattern.permute.xlu0 1
        %364 = vperm.xlu0 %363, %v339
        %v365 = vpop.permute.xlu0 %364
        %366 = vset.pattern.permute.xlu0 1
        %367 = vperm.xlu0 %366, %v340
        %v368 = vpop.permute.xlu0 %367
        %369 = vset.pattern.permute.xlu0 1
        %370 = vperm.xlu0 %369, %v341
        %v371 = vpop.permute.xlu0 %370
        %372 = vset.pattern.permute.xlu0 1
        %373 = vperm.xlu0 %372, %v342
        %v374 = vpop.permute.xlu0 %373
        %375 = vset.pattern.permute.xlu0 1
        %376 = vperm.xlu0 %375, %v343
        %v377 = vpop.permute.xlu0 %376
        %378 = vset.pattern.permute.xlu0 1
        %379 = vperm.xlu0 %378, %v344
        %v380 = vpop.permute.xlu0 %379
        %381 = vset.pattern.permute.xlu0 1
        %382 = vperm.xlu0 %381, %v345
        %v383 = vpop.permute.xlu0 %382
        %384 = vset.pattern.permute.xlu0 1
        %385 = vperm.xlu0 %384, %v346
        %v386 = vpop.permute.xlu0 %385
        %387 = vset.pattern.permute.xlu0 1
        %388 = vperm.xlu0 %387, %v347
        %v389 = vpop.permute.xlu0 %388
        %390 = vset.pattern.permute.xlu0 1
        %391 = vperm.xlu0 %390, %v348
        %v392 = vpop.permute.xlu0 %391
        %393 = vset.pattern.permute.xlu0 1
        %394 = vperm.xlu0 %393, %v349
        %v395 = vpop.permute.xlu0 %394
        %396 = vset.pattern.permute.xlu0 1
        %397 = vperm.xlu0 %396, %v350
        %v398 = vpop.permute.xlu0 %397
        %vm399 = vcmp.eq.s32.totalorder %v270, %v353
        %vm400 = vcmp.eq.s32.totalorder %v270, %v356
        %vm401 = vcmp.eq.s32.totalorder %v270, %v359
        %vm402 = vcmp.eq.s32.totalorder %v270, %v362
        %vm403 = vcmp.eq.s32.totalorder %v270, %v365
        %vm404 = vcmp.eq.s32.totalorder %v270, %v368
        %vm405 = vcmp.eq.s32.totalorder %v270, %v371
        %vm406 = vcmp.eq.s32.totalorder %v270, %v374
        %vm407 = vcmp.eq.s32.totalorder %v270, %v377
        %vm408 = vcmp.eq.s32.totalorder %v270, %v380
        %vm409 = vcmp.eq.s32.totalorder %v270, %v383
        %vm410 = vcmp.eq.s32.totalorder %v270, %v386
        %vm411 = vcmp.eq.s32.totalorder %v270, %v389
        %vm412 = vcmp.eq.s32.totalorder %v270, %v392
        %vm413 = vcmp.eq.s32.totalorder %v270, %v395
        %vm414 = vcmp.eq.s32.totalorder %v270, %v398
        %vm415 = vmor %vm319, %vm399
        %vm416 = vmor %vm320, %vm400
        %vm417 = vmor %vm321, %vm401
        %vm418 = vmor %vm322, %vm402
        %vm419 = vmor %vm323, %vm403
        %vm420 = vmor %vm324, %vm404
        %vm421 = vmor %vm325, %vm405
        %vm422 = vmor %vm326, %vm406
        %vm423 = vmor %vm327, %vm407
        %vm424 = vmor %vm328, %vm408
        %vm425 = vmor %vm329, %vm409
        %vm426 = vmor %vm330, %vm410
        %vm427 = vmor %vm331, %vm411
        %vm428 = vmor %vm332, %vm412
        %vm429 = vmor %vm333, %vm413
        %vm430 = vmor %vm334, %vm414
        %v431 = vadd.s32 %v253, 30
        %v432 = vadd.s32 %v254, 30
        %v433 = vadd.s32 %v255, 30
        %v434 = vadd.s32 %v256, 30
        %v435 = vadd.s32 %v257, 30
        %v436 = vadd.s32 %v258, 30
        %v437 = vadd.s32 %v259, 30
        %v438 = vadd.s32 %v260, 30
        %v439 = vadd.s32 %v261, 30
        %v440 = vadd.s32 %v262, 30
        %v441 = vadd.s32 %v263, 30
        %v442 = vadd.s32 %v264, 30
        %v443 = vadd.s32 %v265, 30
        %v444 = vadd.s32 %v266, 30
        %v445 = vadd.s32 %v267, 30
        %v446 = vadd.s32 %v268, 30
        %447 = vset.pattern.permute.xlu0 2
        %448 = vperm.xlu0 %447, %v431
        %v449 = vpop.permute.xlu0 %448
        %450 = vset.pattern.permute.xlu0 2
        %451 = vperm.xlu0 %450, %v432
        %v452 = vpop.permute.xlu0 %451
        %453 = vset.pattern.permute.xlu0 2
        %454 = vperm.xlu0 %453, %v433
        %v455 = vpop.permute.xlu0 %454
        %456 = vset.pattern.permute.xlu0 2
        %457 = vperm.xlu0 %456, %v434
        %v458 = vpop.permute.xlu0 %457
        %459 = vset.pattern.permute.xlu0 2
        %460 = vperm.xlu0 %459, %v435
        %v461 = vpop.permute.xlu0 %460
        %462 = vset.pattern.permute.xlu0 2
        %463 = vperm.xlu0 %462, %v436
        %v464 = vpop.permute.xlu0 %463
        %465 = vset.pattern.permute.xlu0 2
        %466 = vperm.xlu0 %465, %v437
        %v467 = vpop.permute.xlu0 %466
        %468 = vset.pattern.permute.xlu0 2
        %469 = vperm.xlu0 %468, %v438
        %v470 = vpop.permute.xlu0 %469
        %471 = vset.pattern.permute.xlu0 2
        %472 = vperm.xlu0 %471, %v439
        %v473 = vpop.permute.xlu0 %472
        %474 = vset.pattern.permute.xlu0 2
        %475 = vperm.xlu0 %474, %v440
        %v476 = vpop.permute.xlu0 %475
        %477 = vset.pattern.permute.xlu0 2
        %478 = vperm.xlu0 %477, %v441
        %v479 = vpop.permute.xlu0 %478
        %480 = vset.pattern.permute.xlu0 2
        %481 = vperm.xlu0 %480, %v442
        %v482 = vpop.permute.xlu0 %481
        %483 = vset.pattern.permute.xlu0 2
        %484 = vperm.xlu0 %483, %v443
        %v485 = vpop.permute.xlu0 %484
        %486 = vset.pattern.permute.xlu0 2
        %487 = vperm.xlu0 %486, %v444
        %v488 = vpop.permute.xlu0 %487
        %489 = vset.pattern.permute.xlu0 2
        %490 = vperm.xlu0 %489, %v445
        %v491 = vpop.permute.xlu0 %490
        %492 = vset.pattern.permute.xlu0 2
        %493 = vperm.xlu0 %492, %v446
        %v494 = vpop.permute.xlu0 %493
        %vm495 = vcmp.eq.s32.totalorder %v270, %v449
        %vm496 = vcmp.eq.s32.totalorder %v270, %v452
        %vm497 = vcmp.eq.s32.totalorder %v270, %v455
        %vm498 = vcmp.eq.s32.totalorder %v270, %v458
        %vm499 = vcmp.eq.s32.totalorder %v270, %v461
        %vm500 = vcmp.eq.s32.totalorder %v270, %v464
        %vm501 = vcmp.eq.s32.totalorder %v270, %v467
        %vm502 = vcmp.eq.s32.totalorder %v270, %v470
        %vm503 = vcmp.eq.s32.totalorder %v270, %v473
        %vm504 = vcmp.eq.s32.totalorder %v270, %v476
        %vm505 = vcmp.eq.s32.totalorder %v270, %v479
        %vm506 = vcmp.eq.s32.totalorder %v270, %v482
        %vm507 = vcmp.eq.s32.totalorder %v270, %v485
        %vm508 = vcmp.eq.s32.totalorder %v270, %v488
        %vm509 = vcmp.eq.s32.totalorder %v270, %v491
        %vm510 = vcmp.eq.s32.totalorder %v270, %v494
        %vm511 = vmor %vm415, %vm495
        %vm512 = vmor %vm416, %vm496
        %vm513 = vmor %vm417, %vm497
        %vm514 = vmor %vm418, %vm498
        %vm515 = vmor %vm419, %vm499
        %vm516 = vmor %vm420, %vm500
        %vm517 = vmor %vm421, %vm501
        %vm518 = vmor %vm422, %vm502
        %vm519 = vmor %vm423, %vm503
        %vm520 = vmor %vm424, %vm504
        %vm521 = vmor %vm425, %vm505
        %vm522 = vmor %vm426, %vm506
        %vm523 = vmor %vm427, %vm507
        %vm524 = vmor %vm428, %vm508
        %vm525 = vmor %vm429, %vm509
        %vm526 = vmor %vm430, %vm510
        %v527 = vsel %vm511, 1, 0
        %v528 = vsel %vm512, 1, 0
        %v529 = vsel %vm513, 1, 0
        %v530 = vsel %vm514, 1, 0
        %v531 = vsel %vm515, 1, 0
        %v532 = vsel %vm516, 1, 0
        %v533 = vsel %vm517, 1, 0
        %v534 = vsel %vm518, 1, 0
        %v535 = vsel %vm519, 1, 0
        %v536 = vsel %vm520, 1, 0
        %v537 = vsel %vm521, 1, 0
        %v538 = vsel %vm522, 1, 0
        %v539 = vsel %vm523, 1, 0
        %v540 = vsel %vm524, 1, 0
        %v541 = vsel %vm525, 1, 0
        %v542 = vsel %vm526, 1, 0
        %v543 = vcvt.s32.f32 %v527
        %v544 = vcvt.s32.f32 %v528
        %v545 = vcvt.s32.f32 %v529
        %v546 = vcvt.s32.f32 %v530
        %v547 = vcvt.s32.f32 %v531
        %v548 = vcvt.s32.f32 %v532
        %v549 = vcvt.s32.f32 %v533
        %v550 = vcvt.s32.f32 %v534
        %v551 = vcvt.s32.f32 %v535
        %v552 = vcvt.s32.f32 %v536
        %v553 = vcvt.s32.f32 %v537
        %v554 = vcvt.s32.f32 %v538
        %v555 = vcvt.s32.f32 %v539
        %v556 = vcvt.s32.f32 %v540
        %v557 = vcvt.s32.f32 %v541
        %v558 = vcvt.s32.f32 %v542
        %v559 = vld [vmem:[%s1] sm:$0xff]
        %v560 = vld [vmem:[%s1 + $0x8] sm:$0xff]
        %v561 = vld [vmem:[%s1 + $0x10] sm:$0xff]
        %v562 = vld [vmem:[%s1 + $0x18] sm:$0xff]
        %v563 = vld [vmem:[%s1 + $0x20] sm:$0xff]
        %v564 = vld [vmem:[%s1 + $0x28] sm:$0x1f]
        %vm565 = vcmask 367616
        %v567 = vsel %vm565, %v543, 0
        %v570 = vsel %vm565, %v544, 0
        %v573 = vsel %vm565, %v545, 0
        %v576 = vsel %vm565, %v546, 0
        %v579 = vsel %vm565, %v547, 0
        %v582 = vsel %vm565, %v548, 0
        %v585 = vsel %vm565, %v549, 0
        %v588 = vsel %vm565, %v550, 0
        %v591 = vsel %vm565, %v551, 0
        %v594 = vsel %vm565, %v552, 0
        %v597 = vsel %vm565, %v553, 0
        %v600 = vsel %vm565, %v554, 0
        %v603 = vsel %vm565, %v555, 0
        %v606 = vsel %vm565, %v556, 0
        %v609 = vsel %vm565, %v557, 0
        %v612 = vsel %vm565, %v558, 0
        %vm614 = vcmask 1044480
        %v616 = vsel %vm614, %v564, 0
        %618 = vmatprep.subr.mxu0 0.0
        %619 = vmatpush1.msra.mxu0 %v559
        %620 = vmatprep.subr.mxu0 0.0
        %621 = vmatpush1.msra.mxu0 %v560
        %622 = vmatprep.subr.mxu0 0.0
        %623 = vmatpush1.msra.mxu0 %v561
        %624 = vmatprep.subr.mxu0 0.0
        %625 = vmatpush1.msra.mxu0 %v562
        %626 = vmatprep.subr.mxu0 0.0
        %627 = vmatpush1.msra.mxu0 %v563
        %628 = vmatprep.subr.mxu0 0.0
        %629 = vmatpush1.msra.mxu0 %v616
        %630 = vmatprep.subr.mxu0 0.0
        %631 = vmatpush1.msra.mxu0 0.0
        %632 = vmatprep.subr.mxu0 0.0
        %633 = vmatpush1.msra.mxu0 0.0
        %634 = vmatprep.subr.mxu0 0.0
        %635 = vmatpush1.msra.mxu0 0.0
        %636 = vmatprep.subr.mxu0 0.0
        %637 = vmatpush1.msra.mxu0 0.0
        %638 = vmatprep.subr.mxu0 0.0
        %639 = vmatpush1.msra.mxu0 0.0
        %640 = vmatprep.subr.mxu0 0.0
        %641 = vmatpush1.msra.mxu0 0.0
        %642 = vmatprep.subr.mxu0 0.0
        %643 = vmatpush1.msra.mxu0 0.0
        %644 = vmatprep.subr.mxu0 0.0
        %645 = vmatpush1.msra.mxu0 0.0
        %646 = vmatprep.subr.mxu0 0.0
        %647 = vmatpush1.msra.mxu0 0.0
        %648 = vmatprep.subr.mxu0 0.0
        %649 = vmatpush1.msra.mxu0 0.0
        %650 = vmatprep.subr.mxu0 0.0
        %651 = vmatpush1.msra.mxu0 0.0
        %652 = vmatprep.subr.mxu0 0.0
        %653 = vmatpush1.msra.mxu0 0.0
        %654 = vmatprep.subr.mxu0 0.0
        %655 = vmatpush1.msra.mxu0 0.0
        %656 = vmatprep.subr.mxu0 0.0
        %657 = vmatpush1.msra.mxu0 0.0
        %658 = vmatprep.subr.mxu0 0.0
        %659 = vmatpush1.msra.mxu0 0.0
        %660 = vmatprep.subr.mxu0 0.0
        %661 = vmatpush1.msra.mxu0 0.0
        %662 = vmatprep.subr.mxu0 0.0
        %663 = vmatpush1.msra.mxu0 0.0
        %664 = vmatprep.subr.mxu0 0.0
        %665 = vmatpush1.msra.mxu0 0.0
        %666 = vmatprep.subr.mxu0 0.0
        %667 = vmatpush1.msra.mxu0 0.0
        %668 = vmatprep.subr.mxu0 0.0
        %669 = vmatpush1.msra.mxu0 0.0
        %670 = vmatprep.subr.mxu0 0.0
        %671 = vmatpush1.msra.mxu0 0.0
        %672 = vmatprep.subr.mxu0 0.0
        %673 = vmatpush1.msra.mxu0 0.0
        %674 = vmatprep.subr.mxu0 0.0
        %675 = vmatpush1.msra.mxu0 0.0
        %676 = vmatprep.subr.mxu0 0.0
        %677 = vmatpush1.msra.mxu0 0.0
        %678 = vmatprep.subr.mxu0 0.0
        %679 = vmatpush1.msra.mxu0 0.0
        %680 = vmatprep.subr.mxu0 0.0
        %681 = vmatpush1.msra.mxu0 0.0
        %682 = vmatprep.mubr.f32.mxu0 0.0
        %683 = vmatmul.mubr.f32.gmra.mrb[0].mxu0 %v567
        %v684 = vpop.f32.mrb[0].mxu0
        %v685 = vadd.f32 0.0, %v684
        %v686 = vpop.f32.mrb[0].mxu0
        %687 = vmatprep.mubr.f32.mxu0 0.0
        %688 = vmatmul.mubr.f32.gmra.mrb[0].mxu0 %v570
        %v689 = vpop.f32.mrb[0].mxu0
        %v690 = vadd.f32 0.0, %v689
        %v691 = vpop.f32.mrb[0].mxu0
        %692 = vmatprep.mubr.f32.mxu0 0.0
        %693 = vmatmul.mubr.f32.gmra.mrb[0].mxu0 %v573
        %v694 = vpop.f32.mrb[0].mxu0
        %v695 = vadd.f32 0.0, %v694
        %v696 = vpop.f32.mrb[0].mxu0
        %697 = vmatprep.mubr.f32.mxu0 0.0
        %698 = vmatmul.mubr.f32.gmra.mrb[0].mxu0 %v576
        %v699 = vpop.f32.mrb[0].mxu0
        %v700 = vadd.f32 0.0, %v699
        %v701 = vpop.f32.mrb[0].mxu0
        %702 = vmatprep.mubr.f32.mxu0 0.0
        %703 = vmatmul.mubr.f32.gmra.mrb[0].mxu0 %v579
        %v704 = vpop.f32.mrb[0].mxu0
        %v705 = vadd.f32 0.0, %v704
        %v706 = vpop.f32.mrb[0].mxu0
        %707 = vmatprep.mubr.f32.mxu0 0.0
        %708 = vmatmul.mubr.f32.gmra.mrb[0].mxu0 %v582
        %v709 = vpop.f32.mrb[0].mxu0
        %v710 = vadd.f32 0.0, %v709
        %v711 = vpop.f32.mrb[0].mxu0
        %712 = vmatprep.mubr.f32.mxu0 0.0
        %713 = vmatmul.mubr.f32.gmra.mrb[0].mxu0 %v585
        %v714 = vpop.f32.mrb[0].mxu0
        %v715 = vadd.f32 0.0, %v714
        %v716 = vpop.f32.mrb[0].mxu0
        %717 = vmatprep.mubr.f32.mxu0 0.0
        %718 = vmatmul.mubr.f32.gmra.mrb[0].mxu0 %v588
        %v719 = vpop.f32.mrb[0].mxu0
        %v720 = vadd.f32 0.0, %v719
        %v721 = vpop.f32.mrb[0].mxu0
        %722 = vmatprep.mubr.f32.mxu0 0.0
        %723 = vmatmul.mubr.f32.gmra.mrb[0].mxu0 %v591
        %v724 = vpop.f32.mrb[0].mxu0
        %v725 = vadd.f32 0.0, %v724
        %v726 = vpop.f32.mrb[0].mxu0
        %727 = vmatprep.mubr.f32.mxu0 0.0
        %728 = vmatmul.mubr.f32.gmra.mrb[0].mxu0 %v594
        %v729 = vpop.f32.mrb[0].mxu0
        %v730 = vadd.f32 0.0, %v729
        %v731 = vpop.f32.mrb[0].mxu0
        %732 = vmatprep.mubr.f32.mxu0 0.0
        %733 = vmatmul.mubr.f32.gmra.mrb[0].mxu0 %v597
        %v734 = vpop.f32.mrb[0].mxu0
        %v735 = vadd.f32 0.0, %v734
        %v736 = vpop.f32.mrb[0].mxu0
        %737 = vmatprep.mubr.f32.mxu0 0.0
        %738 = vmatmul.mubr.f32.gmra.mrb[0].mxu0 %v600
        %v739 = vpop.f32.mrb[0].mxu0
        %v740 = vadd.f32 0.0, %v739
        %v741 = vpop.f32.mrb[0].mxu0
        %742 = vmatprep.mubr.f32.mxu0 0.0
        %743 = vmatmul.mubr.f32.gmra.mrb[0].mxu0 %v603
        %v744 = vpop.f32.mrb[0].mxu0
        %v745 = vadd.f32 0.0, %v744
        %v746 = vpop.f32.mrb[0].mxu0
        %747 = vmatprep.mubr.f32.mxu0 0.0
        %748 = vmatmul.mubr.f32.gmra.mrb[0].mxu0 %v606
        %v749 = vpop.f32.mrb[0].mxu0
        %v750 = vadd.f32 0.0, %v749
        %v751 = vpop.f32.mrb[0].mxu0
        %752 = vmatprep.mubr.f32.mxu0 0.0
        %753 = vmatmul.mubr.f32.gmra.mrb[0].mxu0 %v609
        %v754 = vpop.f32.mrb[0].mxu0
        %v755 = vadd.f32 0.0, %v754
        %v756 = vpop.f32.mrb[0].mxu0
        %757 = vmatprep.mubr.f32.mxu0 0.0
        %758 = vmatmul.mubr.f32.gmra.mrb[0].mxu0 %v612
        %v759 = vpop.f32.mrb[0].mxu0
        %v760 = vadd.f32 0.0, %v759
        %v761 = vpop.f32.mrb[0].mxu0
        %762 = vdwg.mxu0
        %v763 = vld [vmem:[%s2] sm:$0xff]
        %v764 = vld [vmem:[%s2 + $0x8] sm:$0xff]
        %v765 = vld [vmem:[%s2 + $0x10] sm:$0xff]
        %v766 = vld [vmem:[%s2 + $0x18] sm:$0xff]
        %v767 = vld [vmem:[%s3] sm:$0x1]
        %v769 = vlaneseq
        %v770 = vshrl.u32 %v769, 7
        %v771 = vsub.s32 0, %v770
        %v772 = vrot.slane %v767, %v771
        %vm774 = vcmask 261120
        %v776 = vsel %vm774, %v685, 0
        %v779 = vsel %vm774, %v690, 0
        %v782 = vsel %vm774, %v695, 0
        %v785 = vsel %vm774, %v700, 0
        %v788 = vsel %vm774, %v705, 0
        %v791 = vsel %vm774, %v710, 0
        %v794 = vsel %vm774, %v715, 0
        %v797 = vsel %vm774, %v720, 0
        %v800 = vsel %vm774, %v725, 0
        %v803 = vsel %vm774, %v730, 0
        %v806 = vsel %vm774, %v735, 0
        %v809 = vsel %vm774, %v740, 0
        %v812 = vsel %vm774, %v745, 0
        %v815 = vsel %vm774, %v750, 0
        %v818 = vsel %vm774, %v755, 0
        %v821 = vsel %vm774, %v760, 0
        %823 = vmatprep.subr.mxu0 0.0
        %824 = vmatpush1.msra.mxu0 %v763
        %825 = vmatprep.subr.mxu0 0.0
        %826 = vmatpush1.msra.mxu0 %v764
        %827 = vmatprep.subr.mxu0 0.0
        %828 = vmatpush1.msra.mxu0 %v765
        %829 = vmatprep.subr.mxu0 0.0
        %830 = vmatpush1.msra.mxu0 %v766
        %831 = vmatprep.subr.mxu0 0.0
        %832 = vmatpush1.msra.mxu0 0.0
        %833 = vmatprep.subr.mxu0 0.0
        %834 = vmatpush1.msra.mxu0 0.0
        %835 = vmatprep.subr.mxu0 0.0
        %836 = vmatpush1.msra.mxu0 0.0
        %837 = vmatprep.subr.mxu0 0.0
        %838 = vmatpush1.msra.mxu0 0.0
        %839 = vmatprep.subr.mxu0 0.0
        %840 = vmatpush1.msra.mxu0 0.0
        %841 = vmatprep.subr.mxu0 0.0
        %842 = vmatpush1.msra.mxu0 0.0
        %843 = vmatprep.subr.mxu0 0.0
        %844 = vmatpush1.msra.mxu0 0.0
        %845 = vmatprep.subr.mxu0 0.0
        %846 = vmatpush1.msra.mxu0 0.0
        %847 = vmatprep.subr.mxu0 0.0
        %848 = vmatpush1.msra.mxu0 0.0
        %849 = vmatprep.subr.mxu0 0.0
        %850 = vmatpush1.msra.mxu0 0.0
        %851 = vmatprep.subr.mxu0 0.0
        %852 = vmatpush1.msra.mxu0 0.0
        %853 = vmatprep.subr.mxu0 0.0
        %854 = vmatpush1.msra.mxu0 0.0
        %855 = vmatprep.subr.mxu0 0.0
        %856 = vmatpush1.msra.mxu0 0.0
        %857 = vmatprep.subr.mxu0 0.0
        %858 = vmatpush1.msra.mxu0 0.0
        %859 = vmatprep.subr.mxu0 0.0
        %860 = vmatpush1.msra.mxu0 0.0
        %861 = vmatprep.subr.mxu0 0.0
        %862 = vmatpush1.msra.mxu0 0.0
        %863 = vmatprep.subr.mxu0 0.0
        %864 = vmatpush1.msra.mxu0 0.0
        %865 = vmatprep.subr.mxu0 0.0
        %866 = vmatpush1.msra.mxu0 0.0
        %867 = vmatprep.subr.mxu0 0.0
        %868 = vmatpush1.msra.mxu0 0.0
        %869 = vmatprep.subr.mxu0 0.0
        %870 = vmatpush1.msra.mxu0 0.0
        %871 = vmatprep.subr.mxu0 0.0
        %872 = vmatpush1.msra.mxu0 0.0
        %873 = vmatprep.subr.mxu0 0.0
        %874 = vmatpush1.msra.mxu0 0.0
        %875 = vmatprep.subr.mxu0 0.0
        %876 = vmatpush1.msra.mxu0 0.0
        %877 = vmatprep.subr.mxu0 0.0
        %878 = vmatpush1.msra.mxu0 0.0
        %879 = vmatprep.subr.mxu0 0.0
        %880 = vmatpush1.msra.mxu0 0.0
        %881 = vmatprep.subr.mxu0 0.0
        %882 = vmatpush1.msra.mxu0 0.0
        %883 = vmatprep.subr.mxu0 0.0
        %884 = vmatpush1.msra.mxu0 0.0
        %885 = vmatprep.subr.mxu0 0.0
        %886 = vmatpush1.msra.mxu0 0.0
        %887 = vmatprep.mubr.f32.mxu0 0.0
        %888 = vmatmul.mubr.f32.gmra.mrb[0].mxu0 %v776
        %v889 = vpop.f32.mrb[0].mxu0
        %v890 = vadd.f32 %v772, %v889
        %v891 = vpop.f32.mrb[0].mxu0
        %892 = vmatprep.mubr.f32.mxu0 0.0
        %893 = vmatmul.mubr.f32.gmra.mrb[0].mxu0 %v779
        %v894 = vpop.f32.mrb[0].mxu0
        %v895 = vadd.f32 %v772, %v894
        %v896 = vpop.f32.mrb[0].mxu0
        %897 = vmatprep.mubr.f32.mxu0 0.0
        %898 = vmatmul.mubr.f32.gmra.mrb[0].mxu0 %v782
        %v899 = vpop.f32.mrb[0].mxu0
        %v900 = vadd.f32 %v772, %v899
        %v901 = vpop.f32.mrb[0].mxu0
        %902 = vmatprep.mubr.f32.mxu0 0.0
        %903 = vmatmul.mubr.f32.gmra.mrb[0].mxu0 %v785
        %v904 = vpop.f32.mrb[0].mxu0
        %v905 = vadd.f32 %v772, %v904
        %v906 = vpop.f32.mrb[0].mxu0
        %907 = vmatprep.mubr.f32.mxu0 0.0
        %908 = vmatmul.mubr.f32.gmra.mrb[0].mxu0 %v788
        %v909 = vpop.f32.mrb[0].mxu0
        %v910 = vadd.f32 %v772, %v909
        %v911 = vpop.f32.mrb[0].mxu0
        %912 = vmatprep.mubr.f32.mxu0 0.0
        %913 = vmatmul.mubr.f32.gmra.mrb[0].mxu0 %v791
        %v914 = vpop.f32.mrb[0].mxu0
        %v915 = vadd.f32 %v772, %v914
        %v916 = vpop.f32.mrb[0].mxu0
        %917 = vmatprep.mubr.f32.mxu0 0.0
        %918 = vmatmul.mubr.f32.gmra.mrb[0].mxu0 %v794
        %v919 = vpop.f32.mrb[0].mxu0
        %v920 = vadd.f32 %v772, %v919
        %v921 = vpop.f32.mrb[0].mxu0
        %922 = vmatprep.mubr.f32.mxu0 0.0
        %923 = vmatmul.mubr.f32.gmra.mrb[0].mxu0 %v797
        %v924 = vpop.f32.mrb[0].mxu0
        %v925 = vadd.f32 %v772, %v924
        %v926 = vpop.f32.mrb[0].mxu0
        %927 = vmatprep.mubr.f32.mxu0 0.0
        %928 = vmatmul.mubr.f32.gmra.mrb[0].mxu0 %v800
        %v929 = vpop.f32.mrb[0].mxu0
        %v930 = vadd.f32 %v772, %v929
        %v931 = vpop.f32.mrb[0].mxu0
        %932 = vmatprep.mubr.f32.mxu0 0.0
        %933 = vmatmul.mubr.f32.gmra.mrb[0].mxu0 %v803
        %v934 = vpop.f32.mrb[0].mxu0
        %v935 = vadd.f32 %v772, %v934
        %v936 = vpop.f32.mrb[0].mxu0
        %937 = vmatprep.mubr.f32.mxu0 0.0
        %938 = vmatmul.mubr.f32.gmra.mrb[0].mxu0 %v806
        %v939 = vpop.f32.mrb[0].mxu0
        %v940 = vadd.f32 %v772, %v939
        %v941 = vpop.f32.mrb[0].mxu0
        %942 = vmatprep.mubr.f32.mxu0 0.0
        %943 = vmatmul.mubr.f32.gmra.mrb[0].mxu0 %v809
        %v944 = vpop.f32.mrb[0].mxu0
        %v945 = vadd.f32 %v772, %v944
        %v946 = vpop.f32.mrb[0].mxu0
        %947 = vmatprep.mubr.f32.mxu0 0.0
        %948 = vmatmul.mubr.f32.gmra.mrb[0].mxu0 %v812
        %v949 = vpop.f32.mrb[0].mxu0
        %v950 = vadd.f32 %v772, %v949
        %v951 = vpop.f32.mrb[0].mxu0
        %952 = vmatprep.mubr.f32.mxu0 0.0
        %953 = vmatmul.mubr.f32.gmra.mrb[0].mxu0 %v815
        %v954 = vpop.f32.mrb[0].mxu0
        %v955 = vadd.f32 %v772, %v954
        %v956 = vpop.f32.mrb[0].mxu0
        %957 = vmatprep.mubr.f32.mxu0 0.0
        %958 = vmatmul.mubr.f32.gmra.mrb[0].mxu0 %v818
        %v959 = vpop.f32.mrb[0].mxu0
        %v960 = vadd.f32 %v772, %v959
        %v961 = vpop.f32.mrb[0].mxu0
        %962 = vmatprep.mubr.f32.mxu0 0.0
        %963 = vmatmul.mubr.f32.gmra.mrb[0].mxu0 %v821
        %v964 = vpop.f32.mrb[0].mxu0
        %v965 = vadd.f32 %v772, %v964
        %v966 = vpop.f32.mrb[0].mxu0
        %967 = vdwg.mxu0
        %v968 = vmax.f32 %v890, 0.0
        %v969 = vmax.f32 %v895, 0.0
        %v970 = vmax.f32 %v900, 0.0
        %v971 = vmax.f32 %v905, 0.0
        %v972 = vmax.f32 %v910, 0.0
        %v973 = vmax.f32 %v915, 0.0
        %v974 = vmax.f32 %v920, 0.0
        %v975 = vmax.f32 %v925, 0.0
        %v976 = vmax.f32 %v930, 0.0
        %v977 = vmax.f32 %v935, 0.0
        %v978 = vmax.f32 %v940, 0.0
        %v979 = vmax.f32 %v945, 0.0
        %v980 = vmax.f32 %v950, 0.0
        %v981 = vmax.f32 %v955, 0.0
        %v982 = vmax.f32 %v960, 0.0
        %v983 = vmax.f32 %v965, 0.0
        %v984 = vld [vmem:[%s4] sm:$0xff]
        %v985 = vld [vmem:[%s4 + $0x8] sm:$0xff]
        %v986 = vld [vmem:[%s4 + $0x10] sm:$0xff]
        %v987 = vld [vmem:[%s4 + $0x18] sm:$0xff]
        %v988 = vld [vmem:[%s4 + $0x20] sm:$0xff]
        %v989 = vld [vmem:[%s4 + $0x28] sm:$0xff]
        %v990 = vld [vmem:[%s4 + $0x30] sm:$0xff]
        %v991 = vld [vmem:[%s4 + $0x38] sm:$0xff]
        %v992 = vld [vmem:[%s4 + $0x40] sm:$0xff]
        %v993 = vld [vmem:[%s4 + $0x48] sm:$0xff]
        %v994 = vld [vmem:[%s4 + $0x50] sm:$0xff]
        %v995 = vld [vmem:[%s4 + $0x58] sm:$0xff]
        %v996 = vld [vmem:[%s4 + $0x60] sm:$0xff]
        %v997 = vld [vmem:[%s4 + $0x68] sm:$0xff]
        %v998 = vld [vmem:[%s4 + $0x70] sm:$0xff]
        %v999 = vld [vmem:[%s4 + $0x78] sm:$0xff]
        %v1000 = vld [vmem:[%s5] sm:$0x1]
        %v1002 = vlaneseq
        %v1003 = vshrl.u32 %v1002, 7
        %v1004 = vsub.s32 0, %v1003
        %v1005 = vrot.slane %v1000, %v1004
        %1007 = vmatprep.subr.mxu0 0.0
        %1008 = vmatpush1.msra.mxu0 %v984
        %1009 = vmatprep.subr.mxu0 0.0
        %1010 = vmatpush1.msra.mxu0 %v985
        %1011 = vmatprep.subr.mxu0 0.0
        %1012 = vmatpush1.msra.mxu0 %v986
        %1013 = vmatprep.subr.mxu0 0.0
        %1014 = vmatpush1.msra.mxu0 %v987
        %1015 = vmatprep.subr.mxu0 0.0
        %1016 = vmatpush1.msra.mxu0 %v988
        %1017 = vmatprep.subr.mxu0 0.0
        %1018 = vmatpush1.msra.mxu0 %v989
        %1019 = vmatprep.subr.mxu0 0.0
        %1020 = vmatpush1.msra.mxu0 %v990
        %1021 = vmatprep.subr.mxu0 0.0
        %1022 = vmatpush1.msra.mxu0 %v991
        %1023 = vmatprep.subr.mxu0 0.0
        %1024 = vmatpush1.msra.mxu0 %v992
        %1025 = vmatprep.subr.mxu0 0.0
        %1026 = vmatpush1.msra.mxu0 %v993
        %1027 = vmatprep.subr.mxu0 0.0
        %1028 = vmatpush1.msra.mxu0 %v994
        %1029 = vmatprep.subr.mxu0 0.0
        %1030 = vmatpush1.msra.mxu0 %v995
        %1031 = vmatprep.subr.mxu0 0.0
        %1032 = vmatpush1.msra.mxu0 %v996
        %1033 = vmatprep.subr.mxu0 0.0
        %1034 = vmatpush1.msra.mxu0 %v997
        %1035 = vmatprep.subr.mxu0 0.0
        %1036 = vmatpush1.msra.mxu0 %v998
        %1037 = vmatprep.subr.mxu0 0.0
        %1038 = vmatpush1.msra.mxu0 %v999
        %1039 = vmatprep.subr.mxu0 0.0
        %1040 = vmatpush1.msra.mxu0 0.0
        %1041 = vmatprep.subr.mxu0 0.0
        %1042 = vmatpush1.msra.mxu0 0.0
        %1043 = vmatprep.subr.mxu0 0.0
        %1044 = vmatpush1.msra.mxu0 0.0
        %1045 = vmatprep.subr.mxu0 0.0
        %1046 = vmatpush1.msra.mxu0 0.0
        %1047 = vmatprep.subr.mxu0 0.0
        %1048 = vmatpush1.msra.mxu0 0.0
        %1049 = vmatprep.subr.mxu0 0.0
        %1050 = vmatpush1.msra.mxu0 0.0
        %1051 = vmatprep.subr.mxu0 0.0
        %1052 = vmatpush1.msra.mxu0 0.0
        %1053 = vmatprep.subr.mxu0 0.0
        %1054 = vmatpush1.msra.mxu0 0.0
        %1055 = vmatprep.subr.mxu0 0.0
        %1056 = vmatpush1.msra.mxu0 0.0
        %1057 = vmatprep.subr.mxu0 0.0
        %1058 = vmatpush1.msra.mxu0 0.0
        %1059 = vmatprep.subr.mxu0 0.0
        %1060 = vmatpush1.msra.mxu0 0.0
        %1061 = vmatprep.subr.mxu0 0.0
        %1062 = vmatpush1.msra.mxu0 0.0
        %1063 = vmatprep.subr.mxu0 0.0
        %1064 = vmatpush1.msra.mxu0 0.0
        %1065 = vmatprep.subr.mxu0 0.0
        %1066 = vmatpush1.msra.mxu0 0.0
        %1067 = vmatprep.subr.mxu0 0.0
        %1068 = vmatpush1.msra.mxu0 0.0
        %1069 = vmatprep.subr.mxu0 0.0
        %1070 = vmatpush1.msra.mxu0 0.0
        %1071 = vmatprep.mubr.f32.mxu0 0.0
        %1072 = vmatmul.mubr.f32.gmra.mrb[0].mxu0 %v968
        %v1073 = vpop.f32.mrb[0].mxu0
        %v1074 = vadd.f32 %v1005, %v1073
        %v1075 = vpop.f32.mrb[0].mxu0
        %1076 = vmatprep.mubr.f32.mxu0 0.0
        %1077 = vmatmul.mubr.f32.gmra.mrb[0].mxu0 %v969
        %v1078 = vpop.f32.mrb[0].mxu0
        %v1079 = vadd.f32 %v1005, %v1078
        %v1080 = vpop.f32.mrb[0].mxu0
        %1081 = vmatprep.mubr.f32.mxu0 0.0
        %1082 = vmatmul.mubr.f32.gmra.mrb[0].mxu0 %v970
        %v1083 = vpop.f32.mrb[0].mxu0
        %v1084 = vadd.f32 %v1005, %v1083
        %v1085 = vpop.f32.mrb[0].mxu0
        %1086 = vmatprep.mubr.f32.mxu0 0.0
        %1087 = vmatmul.mubr.f32.gmra.mrb[0].mxu0 %v971
        %v1088 = vpop.f32.mrb[0].mxu0
        %v1089 = vadd.f32 %v1005, %v1088
        %v1090 = vpop.f32.mrb[0].mxu0
        %1091 = vmatprep.mubr.f32.mxu0 0.0
        %1092 = vmatmul.mubr.f32.gmra.mrb[0].mxu0 %v972
        %v1093 = vpop.f32.mrb[0].mxu0
        %v1094 = vadd.f32 %v1005, %v1093
        %v1095 = vpop.f32.mrb[0].mxu0
        %1096 = vmatprep.mubr.f32.mxu0 0.0
        %1097 = vmatmul.mubr.f32.gmra.mrb[0].mxu0 %v973
        %v1098 = vpop.f32.mrb[0].mxu0
        %v1099 = vadd.f32 %v1005, %v1098
        %v1100 = vpop.f32.mrb[0].mxu0
        %1101 = vmatprep.mubr.f32.mxu0 0.0
        %1102 = vmatmul.mubr.f32.gmra.mrb[0].mxu0 %v974
        %v1103 = vpop.f32.mrb[0].mxu0
        %v1104 = vadd.f32 %v1005, %v1103
        %v1105 = vpop.f32.mrb[0].mxu0
        %1106 = vmatprep.mubr.f32.mxu0 0.0
        %1107 = vmatmul.mubr.f32.gmra.mrb[0].mxu0 %v975
        %v1108 = vpop.f32.mrb[0].mxu0
        %v1109 = vadd.f32 %v1005, %v1108
        %v1110 = vpop.f32.mrb[0].mxu0
        %1111 = vmatprep.mubr.f32.mxu0 0.0
        %1112 = vmatmul.mubr.f32.gmra.mrb[0].mxu0 %v976
        %v1113 = vpop.f32.mrb[0].mxu0
        %v1114 = vadd.f32 %v1005, %v1113
        %v1115 = vpop.f32.mrb[0].mxu0
        %1116 = vmatprep.mubr.f32.mxu0 0.0
        %1117 = vmatmul.mubr.f32.gmra.mrb[0].mxu0 %v977
        %v1118 = vpop.f32.mrb[0].mxu0
        %v1119 = vadd.f32 %v1005, %v1118
        %v1120 = vpop.f32.mrb[0].mxu0
        %1121 = vmatprep.mubr.f32.mxu0 0.0
        %1122 = vmatmul.mubr.f32.gmra.mrb[0].mxu0 %v978
        %v1123 = vpop.f32.mrb[0].mxu0
        %v1124 = vadd.f32 %v1005, %v1123
        %v1125 = vpop.f32.mrb[0].mxu0
        %1126 = vmatprep.mubr.f32.mxu0 0.0
        %1127 = vmatmul.mubr.f32.gmra.mrb[0].mxu0 %v979
        %v1128 = vpop.f32.mrb[0].mxu0
        %v1129 = vadd.f32 %v1005, %v1128
        %v1130 = vpop.f32.mrb[0].mxu0
        %1131 = vmatprep.mubr.f32.mxu0 0.0
        %1132 = vmatmul.mubr.f32.gmra.mrb[0].mxu0 %v980
        %v1133 = vpop.f32.mrb[0].mxu0
        %v1134 = vadd.f32 %v1005, %v1133
        %v1135 = vpop.f32.mrb[0].mxu0
        %1136 = vmatprep.mubr.f32.mxu0 0.0
        %1137 = vmatmul.mubr.f32.gmra.mrb[0].mxu0 %v981
        %v1138 = vpop.f32.mrb[0].mxu0
        %v1139 = vadd.f32 %v1005, %v1138
        %v1140 = vpop.f32.mrb[0].mxu0
        %1141 = vmatprep.mubr.f32.mxu0 0.0
        %1142 = vmatmul.mubr.f32.gmra.mrb[0].mxu0 %v982
        %v1143 = vpop.f32.mrb[0].mxu0
        %v1144 = vadd.f32 %v1005, %v1143
        %v1145 = vpop.f32.mrb[0].mxu0
        %1146 = vmatprep.mubr.f32.mxu0 0.0
        %1147 = vmatmul.mubr.f32.gmra.mrb[0].mxu0 %v983
        %v1148 = vpop.f32.mrb[0].mxu0
        %v1149 = vadd.f32 %v1005, %v1148
        %v1150 = vpop.f32.mrb[0].mxu0
        %1151 = vdwg.mxu0
        %1152 = vst [vmem:[%s245] sm:$0xff] %v1074
        %1153 = vst [vmem:[%s245 + $0x8] sm:$0xff] %v1079
        %1154 = vst [vmem:[%s245 + $0x10] sm:$0xff] %v1084
        %1155 = vst [vmem:[%s245 + $0x18] sm:$0xff] %v1089
        %1156 = vst [vmem:[%s245 + $0x20] sm:$0xff] %v1094
        %1157 = vst [vmem:[%s245 + $0x28] sm:$0xff] %v1099
        %1158 = vst [vmem:[%s245 + $0x30] sm:$0xff] %v1104
        %1159 = vst [vmem:[%s245 + $0x38] sm:$0xff] %v1109
        %1160 = vst [vmem:[%s245 + $0x40] sm:$0xff] %v1114
        %1161 = vst [vmem:[%s245 + $0x48] sm:$0xff] %v1119
        %1162 = vst [vmem:[%s245 + $0x50] sm:$0xff] %v1124
        %1163 = vst [vmem:[%s245 + $0x58] sm:$0xff] %v1129
        %1164 = vst [vmem:[%s245 + $0x60] sm:$0xff] %v1134
        %1165 = vst [vmem:[%s245 + $0x68] sm:$0xff] %v1139
        %1166 = vst [vmem:[%s245 + $0x70] sm:$0xff] %v1144
        %1167 = vst [vmem:[%s245 + $0x78] sm:$0xff] %v1149
        %s1168 = sand.u32 %s159, 1
        %s1169 = scalar_lea.sflag [#allocation3], %s1168
        %s1170 = sand.u32 %s159, 1
        %s1171 = smul.addr %s1170, 128
        %s1172 = scalar_lea.vmem [#allocation2], %s1171
        // Predicated region
        $region45: #{tpu_custom_call.1} parent=43 // pred_check
          %p1173 = pneg %p169
        $region46: #{tpu_custom_call.1} parent=43 // pred_check_branch
          %1175 = sbr.rel (%p1173) target = $region48
        $region47: #{tpu_custom_call.1} parent=43 // pred_region
          %s1176 = smul.u32 16, %s20
          %s1178 = ssub.s32 2048, 2048
          %1179 = vsyncadd %s1169, %s1178
          %s1180 = smul.addr %s1176, 128
          %s1181 = scalar_lea.hbm %s6, %s1180
          %s1182 = sshll.u32 %s1172, 4
          %s1183 = int_to_ptr.vmem [resolvable:$true] %s1182
          %1188 = dma.vmem_to_hbm [thread:$0]  %s1183, 2048, %s1181, %s1169, 128, 128, 8
        $region48: #{tpu_custom_call.1} parent=43 // pred_fallthru
          _
      $region44: #{tpu_custom_call.1} parent=5 // pred_fallthru
        _
      %p1189 = scmp.le.s32.totalorder 2, %s15
      // Predicated region
      $region49: #{tpu_custom_call.1} parent=5 // pred_check
        %p1190 = pneg %p1189
      $region50: #{tpu_custom_call.1} parent=5 // pred_check_branch
        %1192 = sbr.rel (%p1190) target = $region52
      $region51: #{tpu_custom_call.1} parent=5 // pred_region
        %s1193 = ssub.s32 %s15, 2
        // Predicated region
        $region53: #{tpu_custom_call.1} parent=51 // pred_check
          %p1194 = pneg %p175
        $region54: #{tpu_custom_call.1} parent=51 // pred_check_branch
          %1196 = sbr.rel (%p1194) target = $region56
        $region55: #{tpu_custom_call.1} parent=51 // pred_region
          %s1197 = sand.u32 %s160, 1
          %s1198 = scalar_lea.sflag [#allocation3], %s1197
          %s1199 = sand.u32 %s160, 1
          %s1200 = smul.addr %s1199, 128
          %s1201 = scalar_lea.vmem [#allocation2], %s1200
          %1202 = dma.done %s1198, 2048
        $region56: #{tpu_custom_call.1} parent=51 // pred_fallthru
          _
      $region52: #{tpu_custom_call.1} parent=5 // pred_fallthru
        _
    $region6: #{tpu_custom_call.1} parent=1 // loop_footer
      %s19 = sadd.s32 1, %s15
    $region7: #{tpu_custom_call.1} parent=1 // loop_footer_branch
      %14 = sbr.rel target = $region3
    $region8: #{tpu_custom_call.1} parent=1 // loop_exit
      _
    %1203 = vsyncpa [#allocation3], 1
    %s1204 = scalar_lea.sflag [#allocation3], 1
    %1205 = vsyncpa %s1204, 1

</llo_original>
